<compile_context>
chip_gen: v7x
topology: tpu7x:2x2x1
jax: 0.10.0
libtpu: 0.0.40
codegen_flags: <defaults>
</compile_context>

<pallas_src>
import numpy as np
import jax
import jax.numpy as jnp
from jax.experimental import pallas as pl
from jax.experimental.pallas import tpu as pltpu


def _round_up(x, m):
    return ((x + m - 1) // m) * m


# ---------------------------------------------------------------------------
# Kernels: small-table fast path (whole table resident in VMEM)
# ---------------------------------------------------------------------------
def _make_vmem_gather_kernel(tile):
    """out[r] = table[ids[r]] via in-VMEM dynamic row loads (exact, no DMAs)."""

    def kernel(ids_ref, table_ref, out_ref):
        # ids_ref: SMEM (n_pad,) int32   table_ref: VMEM (V, 1, E)
        base = pl.program_id(0) * tile
        for r in range(tile):
            gid = ids_ref[base + r]                      # single SMEM read
            out_ref[pl.ds(r, 1), :] = table_ref[gid]     # (1, E) row copy

    return kernel


def _make_vmem_gather_project_kernel(tile):
    """out = feats[ids] @ W, gather via in-VMEM row loads, bf16 MXU matmul."""

    def kernel(ids_ref, feats_ref, w_ref, out_ref, rows):
        # feats_ref: VMEM (V, 1, F_pad)   w_ref: VMEM (F_pad, E) (resident)
        base = pl.program_id(0) * tile
        for r in range(tile):
            gid = ids_ref[base + r]
            rows[pl.ds(r, 1), :] = feats_ref[gid]
        out_ref[...] = jnp.dot(
            rows[...].astype(jnp.bfloat16),
            w_ref[...].astype(jnp.bfloat16),
            preferred_element_type=jnp.float32,
        ).astype(out_ref.dtype)

    return kernel


# ---------------------------------------------------------------------------
# Kernels: large-table path (table stays in HBM, per-row async DMA gather)
# ---------------------------------------------------------------------------
def _make_dma_gather_kernel(tile):
    """out[r] = table[ids[r]]: DMA each row straight into the output block."""

    def kernel(ids_ref, table_ref, out_ref, sems):
        base = pl.program_id(0) * tile
        copies = []
        for r in range(tile):
            gid = ids_ref[base + r]                      # read each id once
            cp = pltpu.make_async_copy(table_ref.at[gid], out_ref.at[r],
                                       sems.at[r])
            cp.start()
            copies.append(cp)
        for cp in copies:                                # wait on stored descs
            cp.wait()

    return kernel


def _make_dma_gather_project_kernel(tile):
    """out = feats[ids] @ W: DMA-gather rows into VMEM scratch, bf16 matmul."""

    def kernel(ids_ref, feats_ref, w_ref, out_ref, rows, sems):
        base = pl.program_id(0) * tile
        copies = []
        for r in range(tile):
            gid = ids_ref[base + r]
            cp = pltpu.make_async_copy(feats_ref.at[gid], rows.at[r],
                                       sems.at[r])
            cp.start()
            copies.append(cp)
        for cp in copies:
            cp.wait()
        out_ref[...] = jnp.dot(
            rows[...].astype(jnp.bfloat16),
            w_ref[...].astype(jnp.bfloat16),
            preferred_element_type=jnp.float32,
        ).astype(out_ref.dtype)

    return kernel


def _project_kernel(x_ref, w_ref, out_ref):
    # Full-graph projection: out_tile = X_tile @ W, bf16 MXU, f32 accumulate.
    out_ref[...] = jnp.dot(
        x_ref[...].astype(jnp.bfloat16),
        w_ref[...].astype(jnp.bfloat16),
        preferred_element_type=jnp.float32,
    ).astype(out_ref.dtype)


# ---------------------------------------------------------------------------
# pallas_call wrappers
# ---------------------------------------------------------------------------
# VMEM budget for the resident-table fast path: the (V, 1, F) layout pads each
# row to 8 sublanes and the lane dim to a multiple of 128, and the pipeline
# double-buffers the block; keep the total under 4 MiB so it is comfortable
# even inside v7x's smaller scoped-VMEM default.
_VMEM_TABLE_BUDGET = 4 * 1024 * 1024


def _resident_table_bytes(v, f):
    return v * 8 * _round_up(f, 128) * 4 * 2   # f32, 8-sublane pad, 2 buffers


def pallas_gather(ids, table, *, max_tile=128,
                  vmem_budget_bytes=_VMEM_TABLE_BUDGET):
    """Row gather table[ids]."""
    ids = jnp.asarray(ids, jnp.int32).reshape(-1)
    n = ids.shape[0]
    v, e = table.shape
    # Clip so a bad id can never drive an out-of-bounds row access.
    # (PyTorch nn.Embedding would raise; clipping keeps the kernel safe.)
    ids = jnp.clip(ids, 0, v - 1)

    tile = min(max_tile, _round_up(n, 8))
    n_pad = _round_up(n, tile)
    ids_pad = jnp.pad(ids, (0, n_pad - n))      # padded rows gather row 0
    grid = (n_pad // tile,)
    cparams = pltpu.CompilerParams(dimension_semantics=("parallel",))

    if _resident_table_bytes(v, e) <= vmem_budget_bytes:
        # Fast path: whole table resident in VMEM, exact in-VMEM row copies.
        table3 = table.reshape(v, 1, e)
        out = pl.pallas_call(
            _make_vmem_gather_kernel(tile),
            out_shape=jax.ShapeDtypeStruct((n_pad, e), table.dtype),
            grid_spec=pltpu.PrefetchScalarGridSpec(
                num_scalar_prefetch=1,
                grid=grid,
                in_specs=[pl.BlockSpec((v, 1, e), lambda i, ids_s: (0, 0, 0))],
                out_specs=pl.BlockSpec((tile, e), lambda i, ids_s: (i, 0)),
            ),
            compiler_params=cparams,
        )(ids_pad, table3)
    else:
        # Large table: HBM-resident, per-row DMA straight into the out block.
        out = pl.pallas_call(
            _make_dma_gather_kernel(tile),
            out_shape=jax.ShapeDtypeStruct((n_pad, e), table.dtype),
            grid_spec=pltpu.PrefetchScalarGridSpec(
                num_scalar_prefetch=1,
                grid=grid,
                in_specs=[pl.BlockSpec(memory_space=pl.ANY)],   # table in HBM
                out_specs=pl.BlockSpec((tile, e), lambda i, ids_s: (i, 0)),
                scratch_shapes=[pltpu.SemaphoreType.DMA((tile,))],
            ),
            compiler_params=cparams,
        )(ids_pad, table)
    return out[:n]


def pallas_gather_project(ids, feats, w, *, max_tile=128,
                          vmem_budget_bytes=_VMEM_TABLE_BUDGET):
    """out = feats[ids] @ W (gather fused with the projection matmul)."""
    ids = jnp.asarray(ids, jnp.int32).reshape(-1)
    n = ids.shape[0]
    v, f_in = feats.shape
    e = w.shape[1]
    ids = jnp.clip(ids, 0, v - 1)

    tile = min(max_tile, _round_up(n, 8))
    n_pad = _round_up(n, tile)
    ids_pad = jnp.pad(ids, (0, n_pad - n))
    grid = (n_pad // tile,)
    cparams = pltpu.CompilerParams(dimension_semantics=("parallel",))

    if _resident_table_bytes(v, f_in) <= vmem_budget_bytes:
        # Fast path: pad the contraction dim to 128 so the MXU is full width;
        # feats cols and W rows get zeros, so results are unchanged.
        f_pad = _round_up(f_in, 128)
        feats_p = feats if f_pad == f_in else jnp.pad(
            feats, ((0, 0), (0, f_pad - f_in)))
        w_p = w if f_pad == f_in else jnp.pad(w, ((0, f_pad - f_in), (0, 0)))
        feats3 = feats_p.reshape(v, 1, f_pad)
        out = pl.pallas_call(
            _make_vmem_gather_project_kernel(tile),
            out_shape=jax.ShapeDtypeStruct((n_pad, e), jnp.float32),
            grid_spec=pltpu.PrefetchScalarGridSpec(
                num_scalar_prefetch=1,
                grid=grid,
                in_specs=[
                    pl.BlockSpec((v, 1, f_pad), lambda i, ids_s: (0, 0, 0)),
                    pl.BlockSpec((f_pad, e), lambda i, ids_s: (0, 0)),  # W resident
                ],
                out_specs=pl.BlockSpec((tile, e), lambda i, ids_s: (i, 0)),
                scratch_shapes=[pltpu.VMEM((tile, f_pad), jnp.float32)],
            ),
            compiler_params=cparams,
        )(ids_pad, feats3, w_p)
    else:
        # Large feature table: HBM-resident feats, DMA-gather rows, bf16 matmul.
        # (K-padding skipped here: it would require an HBM copy of the whole
        # table each call, and this path is gather/memory bound, not MXU bound.)
        out = pl.pallas_call(
            _make_dma_gather_project_kernel(tile),
            out_shape=jax.ShapeDtypeStruct((n_pad, e), jnp.float32),
            grid_spec=pltpu.PrefetchScalarGridSpec(
                num_scalar_prefetch=1,
                grid=grid,
                in_specs=[
                    pl.BlockSpec(memory_space=pl.ANY),                   # feats (HBM)
                    pl.BlockSpec((f_in, e), lambda i, ids_s: (0, 0)),    # W resident
                ],
                out_specs=pl.BlockSpec((tile, e), lambda i, ids_s: (i, 0)),
                scratch_shapes=[
                    pltpu.VMEM((tile, f_in), feats.dtype),
                    pltpu.SemaphoreType.DMA((tile,)),
                ],
            ),
            compiler_params=cparams,
        )(ids_pad, feats, w)
    return out[:n]


def pallas_project(feats, w, *, max_tile=512):
    """Row-tiled feats @ W (full-graph branch), W held resident, bf16 MXU."""
    n, f_in = feats.shape
    e = w.shape[1]
    tile = min(max_tile, _round_up(n, 8))
    n_pad = _round_up(n, tile)
    x = feats if n_pad == n else jnp.pad(feats, ((0, n_pad - n), (0, 0)))

    out = pl.pallas_call(
        _project_kernel,
        out_shape=jax.ShapeDtypeStruct((n_pad, e), jnp.float32),
        grid_spec=pltpu.PrefetchScalarGridSpec(
            num_scalar_prefetch=0,
            grid=(n_pad // tile,),
            in_specs=[
                pl.BlockSpec((tile, f_in), lambda i: (i, 0)),
                pl.BlockSpec((f_in, e), lambda i: (0, 0)),
            ],
            out_specs=pl.BlockSpec((tile, e), lambda i: (i, 0)),
        ),
        compiler_params=pltpu.CompilerParams(
            dimension_semantics=("parallel",)),
    )(x, w)
    return out[:n]


# ---------------------------------------------------------------------------
# RelGraphEmbedding (parameters initialized deterministically in-script)
# ---------------------------------------------------------------------------
class RelGraphEmbeddingPallas:
    def __init__(self, key, ntypes, embedding_size, num_nodes, node_feats,
                 node_feats_projection=False):
        self.ntypes = list(ntypes)
        self.num_nodes = dict(num_nodes)
        self.node_feats = dict(node_feats)
        self.node_feats_projection = node_feats_projection
        self.node_embeddings = {}   # ntype -> (V, E) embedding table
        self.embeddings = {}        # ntype -> (F_in, E) projection matrix
        for ntype in self.ntypes:
            key, k = jax.random.split(key)
            if self.node_feats[ntype] is None:
                # nn.Embedding(num_nodes, embedding_size); init uniform(-1, 1).
                # (sparse=True only affects the backward pass.)
                self.node_embeddings[ntype] = jax.random.uniform(
                    k, (self.num_nodes[ntype], embedding_size),
                    dtype=jnp.float32, minval=-1.0, maxval=1.0)
            elif node_feats_projection:
                # nn.Parameter(F_in, E); xavier_uniform_
                fan_in = self.node_feats[ntype].shape[-1]
                bound = float(np.sqrt(6.0 / (fan_in + embedding_size)))
                self.embeddings[ntype] = jax.random.uniform(
                    k, (fan_in, embedding_size),
                    dtype=jnp.float32, minval=-bound, maxval=bound)

    def __call__(self, in_nodes=None):
        x = {}
        if in_nodes is not None:
            for ntype, nid in in_nodes.items():
                if self.node_feats[ntype] is None:
                    x[ntype] = pallas_gather(nid, self.node_embeddings[ntype])
                elif self.node_feats_projection:
                    x[ntype] = pallas_gather_project(
                        nid, self.node_feats[ntype], self.embeddings[ntype])
                else:
                    x[ntype] = pallas_gather(nid, self.node_feats[ntype])
        else:
            for ntype in self.ntypes:
                if self.node_feats[ntype] is None:
                    # nn.Embedding over all nodes (arange(V)) is just the table.
                    x[ntype] = self.node_embeddings[ntype]
                elif self.node_feats_projection:
                    x[ntype] = pallas_project(
                        self.node_feats[ntype], self.embeddings[ntype])
                else:
                    x[ntype] = self.node_feats[ntype]
        return x

    # pure-JAX reference for correctness checking
    def reference(self, in_nodes=None):
        x = {}
        if in_nodes is not None:
            for ntype, nid in in_nodes.items():
                if self.node_feats[ntype] is None:
                    x[ntype] = self.node_embeddings[ntype][nid]
                elif self.node_feats_projection:
                    x[ntype] = self.node_feats[ntype][nid] @ self.embeddings[ntype]
                else:
                    x[ntype] = self.node_feats[ntype][nid]
        else:
            for ntype in self.ntypes:
                if self.node_feats[ntype] is None:
                    x[ntype] = self.node_embeddings[ntype]
                elif self.node_feats_projection:
                    x[ntype] = self.node_feats[ntype] @ self.embeddings[ntype]
                else:
                    x[ntype] = self.node_feats[ntype]
        return x


# ---------------------------------------------------------------------------
if __name__ == "__main__":
    key = jax.random.PRNGKey(0)
    k_feat, k_param, k_id_u, k_id_i = jax.random.split(key, 4)

    embedding_size = 128
    ntypes = ["user", "item"]
    num_nodes = {"user": 64, "item": 48}
    # "user": no input features -> learned embedding table (gather kernel)
    # "item": 64-dim input features -> projected to 128 (gather + matmul kernel)
    node_feats = {
        "user": None,
        "item": jax.random.normal(k_feat, (num_nodes["item"], 64), dtype=jnp.float32),
    }

    model = RelGraphEmbeddingPallas(
        k_param, ntypes, embedding_size, num_nodes, node_feats,
        node_feats_projection=True)

    in_nodes = {
        "user": jax.random.randint(k_id_u, (16,), 0, num_nodes["user"], dtype=jnp.int32),
        "item": jax.random.randint(k_id_i, (8,), 0, num_nodes["item"], dtype=jnp.int32),
    }

    # minibatch branch (tables are small -> VMEM-resident fast path)
    out = model(in_nodes)
    out = jax.tree_util.tree_map(jax.block_until_ready, out)

    # full-graph branch (in_nodes=None)
    out_full = model(None)
    out_full = jax.tree_util.tree_map(jax.block_until_ready, out_full)

    # correctness vs. pure-JAX reference
    ref = model.reference(in_nodes)
    ref_full = model.reference(None)

    # "user": pure row copies -> bit exact.
    assert out["user"].shape == (16, embedding_size)
    np.testing.assert_array_equal(np.asarray(out["user"]), np.asarray(ref["user"]))
    np.testing.assert_array_equal(np.asarray(out_full["user"]),
                                  np.asarray(ref_full["user"]))

    # "item": bf16 MXU projection with f32 accumulation -> loose tolerance.
    assert out["item"].shape == (8, embedding_size)
    np.testing.assert_allclose(np.asarray(out["item"]), np.asarray(ref["item"]),
                               rtol=5e-2, atol=5e-2)
    np.testing.assert_allclose(np.asarray(out_full["item"]),
                               np.asarray(ref_full["item"]),
                               rtol=5e-2, atol=5e-2)

    # Also exercise the large-table HBM-DMA path (forced by a zero VMEM budget)
    # so both code paths are compiled and verified on-device.
    out_dma_u = jax.block_until_ready(
        pallas_gather(in_nodes["user"], model.node_embeddings["user"],
                      vmem_budget_bytes=0))
    np.testing.assert_array_equal(np.asarray(out_dma_u), np.asarray(ref["user"]))

    out_dma_i = jax.block_until_ready(
        pallas_gather_project(in_nodes["item"], node_feats["item"],
                              model.embeddings["item"], vmem_budget_bytes=0))
    np.testing.assert_allclose(np.asarray(out_dma_i), np.asarray(ref["item"]),
                               rtol=5e-2, atol=5e-2)

    print("KERNEL_OK")
</pallas_src>

<mosaic_0001>
module attributes {stable_mosaic.version = 11 : i64} {
  func.func @kernel(%arg0: i32, %arg1: memref<16xi32, #tpu.memory_space<smem>>, %arg2: memref<64x1x128xf32, #tpu.memory_space<vmem>>, %arg3: memref<16x128xf32, #tpu.memory_space<vmem>>) attributes {dimension_semantics = [#tpu.dimension_semantics<parallel>], iteration_bounds = array<i64: 1>, scalar_prefetch = 1 : i64, scratch_operands = 0 : i64, tpu.core_type = #tpu.core_type<tc>, window_params = [{pipeline_mode = #tpu.pipeline_mode<synchronous>, transform_indices = @transform_0, window_bounds = array<i64: 64, 1, 128>}, {transform_indices = @transform_1, window_bounds = array<i64: 16, 128>}]} {
    %c16_i32 = arith.constant 16 : i32
    %0 = arith.muli %arg0, %c16_i32 : i32
    %c0_i32 = arith.constant 0 : i32
    %1 = arith.addi %0, %c0_i32 : i32
    %2 = arith.index_cast %1 : i32 to index
    %3 = memref.load %arg1[%2] : memref<16xi32, #tpu.memory_space<smem>>
    %4 = arith.index_cast %3 : i32 to index
    %c0 = arith.constant 0 : index
    %c0_0 = arith.constant 0 : index
    %5 = vector.load %arg2[%4, %c0, %c0_0] : memref<64x1x128xf32, #tpu.memory_space<vmem>>, vector<1x1x128xf32>
    %6 = vector.shape_cast %5 : vector<1x1x128xf32> to vector<1x128xf32>
    %c0_1 = arith.constant 0 : index
    %c0_2 = arith.constant 0 : index
    %7 = vector.load %arg3[%c0_1, %c0_2] : memref<16x128xf32, #tpu.memory_space<vmem>>, vector<1x128xf32>
    tpu.vector_store %arg3[%c0_1, %c0_2], %6 {strides = array<i32>} : memref<16x128xf32, #tpu.memory_space<vmem>>, vector<1x128xf32>,
    %c1_i32 = arith.constant 1 : i32
    %8 = arith.addi %0, %c1_i32 : i32
    %9 = arith.index_cast %8 : i32 to index
    %10 = memref.load %arg1[%9] : memref<16xi32, #tpu.memory_space<smem>>
    %11 = arith.index_cast %10 : i32 to index
    %c0_3 = arith.constant 0 : index
    %c0_4 = arith.constant 0 : index
    %12 = vector.load %arg2[%11, %c0_3, %c0_4] : memref<64x1x128xf32, #tpu.memory_space<vmem>>, vector<1x1x128xf32>
    %13 = vector.shape_cast %12 : vector<1x1x128xf32> to vector<1x128xf32>
    %c1 = arith.constant 1 : index
    %c0_5 = arith.constant 0 : index
    %14 = vector.load %arg3[%c1, %c0_5] : memref<16x128xf32, #tpu.memory_space<vmem>>, vector<1x128xf32>
    tpu.vector_store %arg3[%c1, %c0_5], %13 {strides = array<i32>} : memref<16x128xf32, #tpu.memory_space<vmem>>, vector<1x128xf32>,
    %c2_i32 = arith.constant 2 : i32
    %15 = arith.addi %0, %c2_i32 : i32
    %16 = arith.index_cast %15 : i32 to index
    %17 = memref.load %arg1[%16] : memref<16xi32, #tpu.memory_space<smem>>
    %18 = arith.index_cast %17 : i32 to index
    %c0_6 = arith.constant 0 : index
    %c0_7 = arith.constant 0 : index
    %19 = vector.load %arg2[%18, %c0_6, %c0_7] : memref<64x1x128xf32, #tpu.memory_space<vmem>>, vector<1x1x128xf32>
    %20 = vector.shape_cast %19 : vector<1x1x128xf32> to vector<1x128xf32>
    %c2 = arith.constant 2 : index
    %c0_8 = arith.constant 0 : index
    %21 = vector.load %arg3[%c2, %c0_8] : memref<16x128xf32, #tpu.memory_space<vmem>>, vector<1x128xf32>
    tpu.vector_store %arg3[%c2, %c0_8], %20 {strides = array<i32>} : memref<16x128xf32, #tpu.memory_space<vmem>>, vector<1x128xf32>,
    %c3_i32 = arith.constant 3 : i32
    %22 = arith.addi %0, %c3_i32 : i32
    %23 = arith.index_cast %22 : i32 to index
    %24 = memref.load %arg1[%23] : memref<16xi32, #tpu.memory_space<smem>>
    %25 = arith.index_cast %24 : i32 to index
    %c0_9 = arith.constant 0 : index
    %c0_10 = arith.constant 0 : index
    %26 = vector.load %arg2[%25, %c0_9, %c0_10] : memref<64x1x128xf32, #tpu.memory_space<vmem>>, vector<1x1x128xf32>
    %27 = vector.shape_cast %26 : vector<1x1x128xf32> to vector<1x128xf32>
    %c3 = arith.constant 3 : index
    %c0_11 = arith.constant 0 : index
    %28 = vector.load %arg3[%c3, %c0_11] : memref<16x128xf32, #tpu.memory_space<vmem>>, vector<1x128xf32>
    tpu.vector_store %arg3[%c3, %c0_11], %27 {strides = array<i32>} : memref<16x128xf32, #tpu.memory_space<vmem>>, vector<1x128xf32>,
    %c4_i32 = arith.constant 4 : i32
    %29 = arith.addi %0, %c4_i32 : i32
    %30 = arith.index_cast %29 : i32 to index
    %31 = memref.load %arg1[%30] : memref<16xi32, #tpu.memory_space<smem>>
    %32 = arith.index_cast %31 : i32 to index
    %c0_12 = arith.constant 0 : index
    %c0_13 = arith.constant 0 : index
    %33 = vector.load %arg2[%32, %c0_12, %c0_13] : memref<64x1x128xf32, #tpu.memory_space<vmem>>, vector<1x1x128xf32>
    %34 = vector.shape_cast %33 : vector<1x1x128xf32> to vector<1x128xf32>
    %c4 = arith.constant 4 : index
    %c0_14 = arith.constant 0 : index
    %35 = vector.load %arg3[%c4, %c0_14] : memref<16x128xf32, #tpu.memory_space<vmem>>, vector<1x128xf32>
    tpu.vector_store %arg3[%c4, %c0_14], %34 {strides = array<i32>} : memref<16x128xf32, #tpu.memory_space<vmem>>, vector<1x128xf32>,
    %c5_i32 = arith.constant 5 : i32
    %36 = arith.addi %0, %c5_i32 : i32
    %37 = arith.index_cast %36 : i32 to index
    %38 = memref.load %arg1[%37] : memref<16xi32, #tpu.memory_space<smem>>
    %39 = arith.index_cast %38 : i32 to index
    %c0_15 = arith.constant 0 : index
    %c0_16 = arith.constant 0 : index
    %40 = vector.load %arg2[%39, %c0_15, %c0_16] : memref<64x1x128xf32, #tpu.memory_space<vmem>>, vector<1x1x128xf32>
    %41 = vector.shape_cast %40 : vector<1x1x128xf32> to vector<1x128xf32>
    %c5 = arith.constant 5 : index
    %c0_17 = arith.constant 0 : index
    %42 = vector.load %arg3[%c5, %c0_17] : memref<16x128xf32, #tpu.memory_space<vmem>>, vector<1x128xf32>
    tpu.vector_store %arg3[%c5, %c0_17], %41 {strides = array<i32>} : memref<16x128xf32, #tpu.memory_space<vmem>>, vector<1x128xf32>,
    %c6_i32 = arith.constant 6 : i32
    %43 = arith.addi %0, %c6_i32 : i32
    %44 = arith.index_cast %43 : i32 to index
    %45 = memref.load %arg1[%44] : memref<16xi32, #tpu.memory_space<smem>>
    %46 = arith.index_cast %45 : i32 to index
    %c0_18 = arith.constant 0 : index
    %c0_19 = arith.constant 0 : index
    %47 = vector.load %arg2[%46, %c0_18, %c0_19] : memref<64x1x128xf32, #tpu.memory_space<vmem>>, vector<1x1x128xf32>
    %48 = vector.shape_cast %47 : vector<1x1x128xf32> to vector<1x128xf32>
    %c6 = arith.constant 6 : index
    %c0_20 = arith.constant 0 : index
    %49 = vector.load %arg3[%c6, %c0_20] : memref<16x128xf32, #tpu.memory_space<vmem>>, vector<1x128xf32>
    tpu.vector_store %arg3[%c6, %c0_20], %48 {strides = array<i32>} : memref<16x128xf32, #tpu.memory_space<vmem>>, vector<1x128xf32>,
    %c7_i32 = arith.constant 7 : i32
    %50 = arith.addi %0, %c7_i32 : i32
    %51 = arith.index_cast %50 : i32 to index
    %52 = memref.load %arg1[%51] : memref<16xi32, #tpu.memory_space<smem>>
    %53 = arith.index_cast %52 : i32 to index
    %c0_21 = arith.constant 0 : index
    %c0_22 = arith.constant 0 : index
    %54 = vector.load %arg2[%53, %c0_21, %c0_22] : memref<64x1x128xf32, #tpu.memory_space<vmem>>, vector<1x1x128xf32>
    %55 = vector.shape_cast %54 : vector<1x1x128xf32> to vector<1x128xf32>
    %c7 = arith.constant 7 : index
    %c0_23 = arith.constant 0 : index
    %56 = vector.load %arg3[%c7, %c0_23] : memref<16x128xf32, #tpu.memory_space<vmem>>, vector<1x128xf32>
    tpu.vector_store %arg3[%c7, %c0_23], %55 {strides = array<i32>} : memref<16x128xf32, #tpu.memory_space<vmem>>, vector<1x128xf32>,
    %c8_i32 = arith.constant 8 : i32
    %57 = arith.addi %0, %c8_i32 : i32
    %58 = arith.index_cast %57 : i32 to index
    %59 = memref.load %arg1[%58] : memref<16xi32, #tpu.memory_space<smem>>
    %60 = arith.index_cast %59 : i32 to index
    %c0_24 = arith.constant 0 : index
    %c0_25 = arith.constant 0 : index
    %61 = vector.load %arg2[%60, %c0_24, %c0_25] : memref<64x1x128xf32, #tpu.memory_space<vmem>>, vector<1x1x128xf32>
    %62 = vector.shape_cast %61 : vector<1x1x128xf32> to vector<1x128xf32>
    %c8 = arith.constant 8 : index
    %c0_26 = arith.constant 0 : index
    %63 = vector.load %arg3[%c8, %c0_26] : memref<16x128xf32, #tpu.memory_space<vmem>>, vector<1x128xf32>
    tpu.vector_store %arg3[%c8, %c0_26], %62 {strides = array<i32>} : memref<16x128xf32, #tpu.memory_space<vmem>>, vector<1x128xf32>,
    %c9_i32 = arith.constant 9 : i32
    %64 = arith.addi %0, %c9_i32 : i32
    %65 = arith.index_cast %64 : i32 to index
    %66 = memref.load %arg1[%65] : memref<16xi32, #tpu.memory_space<smem>>
    %67 = arith.index_cast %66 : i32 to index
    %c0_27 = arith.constant 0 : index
    %c0_28 = arith.constant 0 : index
    %68 = vector.load %arg2[%67, %c0_27, %c0_28] : memref<64x1x128xf32, #tpu.memory_space<vmem>>, vector<1x1x128xf32>
    %69 = vector.shape_cast %68 : vector<1x1x128xf32> to vector<1x128xf32>
    %c9 = arith.constant 9 : index
    %c0_29 = arith.constant 0 : index
    %70 = vector.load %arg3[%c9, %c0_29] : memref<16x128xf32, #tpu.memory_space<vmem>>, vector<1x128xf32>
    tpu.vector_store %arg3[%c9, %c0_29], %69 {strides = array<i32>} : memref<16x128xf32, #tpu.memory_space<vmem>>, vector<1x128xf32>,
    %c10_i32 = arith.constant 10 : i32
    %71 = arith.addi %0, %c10_i32 : i32
    %72 = arith.index_cast %71 : i32 to index
    %73 = memref.load %arg1[%72] : memref<16xi32, #tpu.memory_space<smem>>
    %74 = arith.index_cast %73 : i32 to index
    %c0_30 = arith.constant 0 : index
    %c0_31 = arith.constant 0 : index
    %75 = vector.load %arg2[%74, %c0_30, %c0_31] : memref<64x1x128xf32, #tpu.memory_space<vmem>>, vector<1x1x128xf32>
    %76 = vector.shape_cast %75 : vector<1x1x128xf32> to vector<1x128xf32>
    %c10 = arith.constant 10 : index
    %c0_32 = arith.constant 0 : index
    %77 = vector.load %arg3[%c10, %c0_32] : memref<16x128xf32, #tpu.memory_space<vmem>>, vector<1x128xf32>
    tpu.vector_store %arg3[%c10, %c0_32], %76 {strides = array<i32>} : memref<16x128xf32, #tpu.memory_space<vmem>>, vector<1x128xf32>,
    %c11_i32 = arith.constant 11 : i32
    %78 = arith.addi %0, %c11_i32 : i32
    %79 = arith.index_cast %78 : i32 to index
    %80 = memref.load %arg1[%79] : memref<16xi32, #tpu.memory_space<smem>>
    %81 = arith.index_cast %80 : i32 to index
    %c0_33 = arith.constant 0 : index
    %c0_34 = arith.constant 0 : index
    %82 = vector.load %arg2[%81, %c0_33, %c0_34] : memref<64x1x128xf32, #tpu.memory_space<vmem>>, vector<1x1x128xf32>
    %83 = vector.shape_cast %82 : vector<1x1x128xf32> to vector<1x128xf32>
    %c11 = arith.constant 11 : index
    %c0_35 = arith.constant 0 : index
    %84 = vector.load %arg3[%c11, %c0_35] : memref<16x128xf32, #tpu.memory_space<vmem>>, vector<1x128xf32>
    tpu.vector_store %arg3[%c11, %c0_35], %83 {strides = array<i32>} : memref<16x128xf32, #tpu.memory_space<vmem>>, vector<1x128xf32>,
    %c12_i32 = arith.constant 12 : i32
    %85 = arith.addi %0, %c12_i32 : i32
    %86 = arith.index_cast %85 : i32 to index
    %87 = memref.load %arg1[%86] : memref<16xi32, #tpu.memory_space<smem>>
    %88 = arith.index_cast %87 : i32 to index
    %c0_36 = arith.constant 0 : index
    %c0_37 = arith.constant 0 : index
    %89 = vector.load %arg2[%88, %c0_36, %c0_37] : memref<64x1x128xf32, #tpu.memory_space<vmem>>, vector<1x1x128xf32>
    %90 = vector.shape_cast %89 : vector<1x1x128xf32> to vector<1x128xf32>
    %c12 = arith.constant 12 : index
    %c0_38 = arith.constant 0 : index
    %91 = vector.load %arg3[%c12, %c0_38] : memref<16x128xf32, #tpu.memory_space<vmem>>, vector<1x128xf32>
    tpu.vector_store %arg3[%c12, %c0_38], %90 {strides = array<i32>} : memref<16x128xf32, #tpu.memory_space<vmem>>, vector<1x128xf32>,
    %c13_i32 = arith.constant 13 : i32
    %92 = arith.addi %0, %c13_i32 : i32
    %93 = arith.index_cast %92 : i32 to index
    %94 = memref.load %arg1[%93] : memref<16xi32, #tpu.memory_space<smem>>
    %95 = arith.index_cast %94 : i32 to index
    %c0_39 = arith.constant 0 : index
    %c0_40 = arith.constant 0 : index
    %96 = vector.load %arg2[%95, %c0_39, %c0_40] : memref<64x1x128xf32, #tpu.memory_space<vmem>>, vector<1x1x128xf32>
    %97 = vector.shape_cast %96 : vector<1x1x128xf32> to vector<1x128xf32>
    %c13 = arith.constant 13 : index
    %c0_41 = arith.constant 0 : index
    %98 = vector.load %arg3[%c13, %c0_41] : memref<16x128xf32, #tpu.memory_space<vmem>>, vector<1x128xf32>
    tpu.vector_store %arg3[%c13, %c0_41], %97 {strides = array<i32>} : memref<16x128xf32, #tpu.memory_space<vmem>>, vector<1x128xf32>,
    %c14_i32 = arith.constant 14 : i32
    %99 = arith.addi %0, %c14_i32 : i32
    %100 = arith.index_cast %99 : i32 to index
    %101 = memref.load %arg1[%100] : memref<16xi32, #tpu.memory_space<smem>>
    %102 = arith.index_cast %101 : i32 to index
    %c0_42 = arith.constant 0 : index
    %c0_43 = arith.constant 0 : index
    %103 = vector.load %arg2[%102, %c0_42, %c0_43] : memref<64x1x128xf32, #tpu.memory_space<vmem>>, vector<1x1x128xf32>
    %104 = vector.shape_cast %103 : vector<1x1x128xf32> to vector<1x128xf32>
    %c14 = arith.constant 14 : index
    %c0_44 = arith.constant 0 : index
    %105 = vector.load %arg3[%c14, %c0_44] : memref<16x128xf32, #tpu.memory_space<vmem>>, vector<1x128xf32>
    tpu.vector_store %arg3[%c14, %c0_44], %104 {strides = array<i32>} : memref<16x128xf32, #tpu.memory_space<vmem>>, vector<1x128xf32>,
    %c15_i32 = arith.constant 15 : i32
    %106 = arith.addi %0, %c15_i32 : i32
    %107 = arith.index_cast %106 : i32 to index
    %108 = memref.load %arg1[%107] : memref<16xi32, #tpu.memory_space<smem>>
    %109 = arith.index_cast %108 : i32 to index
    %c0_45 = arith.constant 0 : index
    %c0_46 = arith.constant 0 : index
    %110 = vector.load %arg2[%109, %c0_45, %c0_46] : memref<64x1x128xf32, #tpu.memory_space<vmem>>, vector<1x1x128xf32>
    %111 = vector.shape_cast %110 : vector<1x1x128xf32> to vector<1x128xf32>
    %c15 = arith.constant 15 : index
    %c0_47 = arith.constant 0 : index
    %112 = vector.load %arg3[%c15, %c0_47] : memref<16x128xf32, #tpu.memory_space<vmem>>, vector<1x128xf32>
    tpu.vector_store %arg3[%c15, %c0_47], %111 {strides = array<i32>} : memref<16x128xf32, #tpu.memory_space<vmem>>, vector<1x128xf32>,
    return
  }
  func.func @transform_0(%arg0: i32, %arg1: memref<16xi32, #tpu.memory_space<smem>>) -> (i32, i32, i32) {
    %c0_i32 = arith.constant 0 : i32
    %c0_i32_0 = arith.constant 0 : i32
    %c0_i32_1 = arith.constant 0 : i32
    %c0_i32_2 = arith.constant 0 : i32
    return %c0_i32, %c0_i32_0, %c0_i32_1 : i32, i32, i32
  }
  func.func @transform_1(%arg0: i32, %arg1: memref<16xi32, #tpu.memory_space<smem>>) -> (i32, i32) {
    %c0_i32 = arith.constant 0 : i32
    %c0_i32_0 = arith.constant 0 : i32
    return %arg0, %c0_i32 : i32, i32
  }
}

</mosaic_0001>

<llo_original>
// kernel: tpu_custom_call.1
$region0: #{tpu_custom_call.1}
  #allocation0 [shape = 'u32[]', space=smem, size = 0x4, offset = 0x4, fixed_abs, tag = 'smem constant byte address 0x4 - core index']
  #allocation1 [shape = 'u32[144,128]{1,0:T(1,128)}', space=vmem, size = 0x12000, scoped, tag = 'internal scratch']
  #allocation2 [shape = 's32[1]{0}', space=sflag, size = 0x4, scoped, tag = 'scoped memory for tpu_custom_call.1']
  #allocation3 [shape = 'u8[512]{0}', space=smem, size = 0x200, scoped, tag = 'prefetched SMEM operand 0']
  %s0 = inlined_call_operand.hbm [shape: s32[16], index: 0, kind: input, shape index: {}]
  %s1 = inlined_call_operand.hbm [shape: f32[64,1,128], index: 1, kind: input, shape index: {}]
  %s2 = inlined_call_operand.hbm [shape: f32[16,128], index: 2, kind: output, shape index: {}]
  %s3 = sld [smem:[#allocation0]]
  $region18: #{tpu_custom_call.1} parent=0
    _
  %s5 = ssub.s32 1, %s3
  %s6 = scalar_select 0, %s5, %s3
  %8 = dma.hbm_to_smem %s0, 16, [#allocation3], [#allocation2]
  %9 = dma.done [#allocation2], 16
  %10 = sfence
  $region1: #{tpu_custom_call.1} parent=0
    #allocation4 [shape = 'u8[32768]{0}', space=vmem, size = 0x8000, scoped, tag = 'input window, operand 1, single buffered']
    #allocation5 [shape = 's32[1]{0}', space=sflag, size = 0x4, scoped, tag = 'scoped memory for tpu_custom_call.1']
    #allocation6 [shape = 's32[1]{0}', space=sflag, size = 0x4, scoped, tag = 'scoped memory for tpu_custom_call.1']
    #allocation7 [shape = 'u8[8192]{0}', space=vmem, size = 0x2000, scoped, tag = 'output window, operand 0, single buffered']
    %11 = vsyncpa [#allocation5], 0
    %12 = vsyncpa [#allocation6], 0
    // Predicated region
    $region2: #{tpu_custom_call.1} parent=1 // pred_check
      _
    $region3: #{tpu_custom_call.1} parent=1 // pred_check_branch
      %14 = sbr.rel (0) target = $region5
    $region4: #{tpu_custom_call.1} parent=1 // pred_region
      %s16 = ssub.s32 1024, 1024
      %17 = vsyncadd [#allocation5], %s16
      %s18 = sshll.u32 [#allocation4], 4
      %s19 = int_to_ptr.vmem [resolvable:$true] %s18
      %24 = dma.hbm_to_vmem [thread:$0]  %s1, 1024, %s19, [#allocation5], 16, 16, 1
    $region5: #{tpu_custom_call.1} parent=1 // pred_fallthru
      _
    // Predicated region
    $region6: #{tpu_custom_call.1} parent=1 // pred_check
      _
    $region7: #{tpu_custom_call.1} parent=1 // pred_check_branch
      %26 = sbr.rel (0) target = $region9
    $region8: #{tpu_custom_call.1} parent=1 // pred_region
      %27 = dma.done [#allocation5], 1024
    $region9: #{tpu_custom_call.1} parent=1 // pred_fallthru
      _
    %s28 = smul.u32 0, 16
    %s29 = sld [smem:[#allocation3 + %s28]]
    %s30 = scalar_lea.vmem [#allocation4], %s29
    %v31 = vld [vmem:[%s30] sm:$0x1]
    %32 = vst [vmem:[#allocation7] sm:$0x1] %v31
    %s33 = sadd.s32 %s28, 1
    %s34 = sld [smem:[#allocation3 + %s33]]
    %s35 = scalar_lea.vmem [#allocation4], %s34
    %v36 = vld [vmem:[%s35] sm:$0x1]
    %37 = vst [vmem:[#allocation7 + $0x1] sm:$0x1] %v36
    %s38 = sadd.s32 %s28, 2
    %s39 = sld [smem:[#allocation3 + %s38]]
    %s40 = scalar_lea.vmem [#allocation4], %s39
    %v41 = vld [vmem:[%s40] sm:$0x1]
    %42 = vst [vmem:[#allocation7 + $0x2] sm:$0x1] %v41
    %s43 = sadd.s32 %s28, 3
    %s44 = sld [smem:[#allocation3 + %s43]]
    %s45 = scalar_lea.vmem [#allocation4], %s44
    %v46 = vld [vmem:[%s45] sm:$0x1]
    %47 = vst [vmem:[#allocation7 + $0x3] sm:$0x1] %v46
    %s48 = sadd.s32 %s28, 4
    %s49 = sld [smem:[#allocation3 + %s48]]
    %s50 = scalar_lea.vmem [#allocation4], %s49
    %v51 = vld [vmem:[%s50] sm:$0x1]
    %52 = vst [vmem:[#allocation7 + $0x4] sm:$0x1] %v51
    %s53 = sadd.s32 %s28, 5
    %s54 = sld [smem:[#allocation3 + %s53]]
    %s55 = scalar_lea.vmem [#allocation4], %s54
    %v56 = vld [vmem:[%s55] sm:$0x1]
    %57 = vst [vmem:[#allocation7 + $0x5] sm:$0x1] %v56
    %s58 = sadd.s32 %s28, 6
    %s59 = sld [smem:[#allocation3 + %s58]]
    %s60 = scalar_lea.vmem [#allocation4], %s59
    %v61 = vld [vmem:[%s60] sm:$0x1]
    %62 = vst [vmem:[#allocation7 + $0x6] sm:$0x1] %v61
    %s63 = sadd.s32 %s28, 7
    %s64 = sld [smem:[#allocation3 + %s63]]
    %s65 = scalar_lea.vmem [#allocation4], %s64
    %v66 = vld [vmem:[%s65] sm:$0x1]
    %67 = vst [vmem:[#allocation7 + $0x7] sm:$0x1] %v66
    %s68 = sadd.s32 %s28, 8
    %s69 = sld [smem:[#allocation3 + %s68]]
    %s70 = scalar_lea.vmem [#allocation4], %s69
    %v71 = vld [vmem:[%s70] sm:$0x1]
    %72 = vst [vmem:[#allocation7 + $0x8] sm:$0x1] %v71
    %s73 = sadd.s32 %s28, 9
    %s74 = sld [smem:[#allocation3 + %s73]]
    %s75 = scalar_lea.vmem [#allocation4], %s74
    %v76 = vld [vmem:[%s75] sm:$0x1]
    %77 = vst [vmem:[#allocation7 + $0x9] sm:$0x1] %v76
    %s78 = sadd.s32 %s28, 10
    %s79 = sld [smem:[#allocation3 + %s78]]
    %s80 = scalar_lea.vmem [#allocation4], %s79
    %v81 = vld [vmem:[%s80] sm:$0x1]
    %82 = vst [vmem:[#allocation7 + $0xa] sm:$0x1] %v81
    %s83 = sadd.s32 %s28, 11
    %s84 = sld [smem:[#allocation3 + %s83]]
    %s85 = scalar_lea.vmem [#allocation4], %s84
    %v86 = vld [vmem:[%s85] sm:$0x1]
    %87 = vst [vmem:[#allocation7 + $0xb] sm:$0x1] %v86
    %s88 = sadd.s32 %s28, 12
    %s89 = sld [smem:[#allocation3 + %s88]]
    %s90 = scalar_lea.vmem [#allocation4], %s89
    %v91 = vld [vmem:[%s90] sm:$0x1]
    %92 = vst [vmem:[#allocation7 + $0xc] sm:$0x1] %v91
    %s93 = sadd.s32 %s28, 13
    %s94 = sld [smem:[#allocation3 + %s93]]
    %s95 = scalar_lea.vmem [#allocation4], %s94
    %v96 = vld [vmem:[%s95] sm:$0x1]
    %97 = vst [vmem:[#allocation7 + $0xd] sm:$0x1] %v96
    %s98 = sadd.s32 %s28, 14
    %s99 = sld [smem:[#allocation3 + %s98]]
    %s100 = scalar_lea.vmem [#allocation4], %s99
    %v101 = vld [vmem:[%s100] sm:$0x1]
    %102 = vst [vmem:[#allocation7 + $0xe] sm:$0x1] %v101
    %s103 = sadd.s32 %s28, 15
    %s104 = sld [smem:[#allocation3 + %s103]]
    %s105 = scalar_lea.vmem [#allocation4], %s104
    %v106 = vld [vmem:[%s105] sm:$0x1]
    %107 = vst [vmem:[#allocation7 + $0xf] sm:$0x1] %v106
    // Predicated region
    $region10: #{tpu_custom_call.1} parent=1 // pred_check
      _
    $region11: #{tpu_custom_call.1} parent=1 // pred_check_branch
      %109 = sbr.rel (0) target = $region13
    $region12: #{tpu_custom_call.1} parent=1 // pred_region
      %s111 = ssub.s32 256, 256
      %112 = vsyncadd [#allocation6], %s111
      %s113 = sshll.u32 [#allocation7], 4
      %s114 = int_to_ptr.vmem [resolvable:$true] %s113
      %119 = dma.vmem_to_hbm [thread:$0]  %s114, 256, %s2, [#allocation6], 128, 128, 8
    $region13: #{tpu_custom_call.1} parent=1 // pred_fallthru
      _
    // Predicated region
    $region14: #{tpu_custom_call.1} parent=1 // pred_check
      _
    $region15: #{tpu_custom_call.1} parent=1 // pred_check_branch
      %121 = sbr.rel (0) target = $region17
    $region16: #{tpu_custom_call.1} parent=1 // pred_region
      %122 = dma.done [#allocation6], 256
    $region17: #{tpu_custom_call.1} parent=1 // pred_fallthru
      _
    %123 = vsyncpa [#allocation5], 1
    %124 = vsyncpa [#allocation6], 1

</llo_original>
